<compile_context>
chip_gen: v5e
topology: v5e:2x2
jax: 0.10.0
libtpu: 0.0.40
codegen_flags: <defaults>
</compile_context>

<pallas_src>
import functools

import jax
import jax.numpy as jnp
from jax.experimental import pallas as pl
from jax.experimental.pallas import tpu as pltpu

_LANE = 128


def _round_up(a, b):
    return ((a + b - 1) // b) * b


def _make_vpu_kernel(c_in, c_out):
    # w_ref: VMEM (c_out, c_in) f32, b_ref: VMEM (c_out, 1) f32
    # x_ref: VMEM (c_in, TILE),      o_ref: VMEM (c_out, TILE)
    def kernel(w_ref, b_ref, x_ref, o_ref):
        # (1, TILE) row sublane-broadcast  x  (c_out, 1) column lane-broadcast
        acc = x_ref[0:1, :].astype(jnp.float32) * w_ref[:, 0:1]
        for ci in range(1, c_in):
            acc = acc + x_ref[ci:ci + 1, :].astype(jnp.float32) * w_ref[:, ci:ci + 1]
        o_ref[...] = (acc + b_ref[...]).astype(o_ref.dtype)

    return kernel


def _mxu_kernel(w_ref, b_ref, x_ref, o_ref):
    # w_ref: (C_out, C_in), x_ref: (C_in, TILE), b_ref: (C_out, 1)
    acc = jnp.dot(w_ref[...], x_ref[...], preferred_element_type=jnp.float32)
    o_ref[...] = (acc + b_ref[...]).astype(o_ref.dtype)


@functools.partial(jax.jit, static_argnames=("tile_m",))
def outconv_forward(x_nchw, weight, bias, *, tile_m=2048):
    """1x1 conv forward.  x: (N,C_in,H,W), weight: (C_out,C_in,1,1), bias: (C_out,)."""
    N, C_in, H, W = x_nchw.shape
    C_out = weight.shape[0]
    HW = H * W

    # Lane-dense pixel tile: multiple of 128, as large as useful, capped by HW.
    tile = min(_round_up(tile_m, _LANE), _round_up(HW, _LANE))
    hw_pad = _round_up(HW, tile)

    x3 = x_nchw.reshape(N, C_in, HW)                 # free reshape, no transpose
    if hw_pad != HW:
        x3 = jnp.pad(x3, ((0, 0), (0, 0), (0, hw_pad - HW)))

    w_arg = weight.reshape(C_out, C_in).astype(jnp.float32)       # (C_out, C_in)
    b_arg = bias.astype(jnp.float32).reshape(C_out, 1)            # (C_out, 1)

    use_vpu = (C_in <= 8) and (C_out <= 16)
    kernel = _make_vpu_kernel(C_in, C_out) if use_vpu else _mxu_kernel

    # Weights/bias: constant index_map -> fetched into VMEM once, resident.
    w_spec = pl.BlockSpec((C_out, C_in), lambda n, m: (0, 0))
    b_spec = pl.BlockSpec((C_out, 1), lambda n, m: (0, 0))

    grid = (N, hw_pad // tile)

    itemsize = jnp.dtype(x_nchw.dtype).itemsize
    working = 2 * tile * (C_in + C_out) * itemsize + (C_out * C_in + C_out) * 4
    vmem_limit = int(min(48 * 1024 * 1024, max(16 * 1024 * 1024, 4 * working)))

    cost = pl.CostEstimate(
        flops=2 * N * hw_pad * C_in * C_out,
        transcendentals=0,
        bytes_accessed=itemsize * N * hw_pad * (C_in + C_out) + 4 * (C_out * C_in + C_out),
    )

    out3 = pl.pallas_call(
        kernel,
        out_shape=jax.ShapeDtypeStruct((N, C_out, hw_pad), x_nchw.dtype),
        grid_spec=pltpu.PrefetchScalarGridSpec(
            num_scalar_prefetch=0,
            grid=grid,
            in_specs=[
                w_spec,
                b_spec,
                pl.BlockSpec((None, C_in, tile), lambda n, m: (n, 0, m)),
            ],
            out_specs=pl.BlockSpec((None, C_out, tile), lambda n, m: (n, 0, m)),
        ),
        compiler_params=pltpu.CompilerParams(
            dimension_semantics=("parallel", "parallel"),
            vmem_limit_bytes=vmem_limit,
        ),
        cost_estimate=cost,
    )(w_arg, b_arg, x3)

    if hw_pad != HW:
        out3 = out3[:, :, :HW]
    return out3.reshape(N, C_out, H, W)


def _reference(x, weight, bias):
    C_out, C_in = weight.shape[0], weight.shape[1]
    return (
        jnp.einsum("nchw,oc->nohw", x, weight.reshape(C_out, C_in),
                   precision=jax.lax.Precision.HIGHEST)
        + bias[None, :, None, None]
    )


if __name__ == "__main__":
    key = jax.random.PRNGKey(0)

    # Primary shape consistent with the module: outconv(4, 8) on (2, 4, 16, 16).
    cases = [
        (2, 4, 8, 16, 16),   # VPU path, HW divides the tile exactly
        (1, 4, 8, 13, 13),   # VPU path, ragged HW -> padded tail tile
        (2, 16, 32, 8, 8),   # MXU path (larger channel counts)
    ]
    for idx, (N, C_in, C_out, H, W) in enumerate(cases):
        kx, kw, kb, key = jax.random.split(key, 4)
        x = jax.random.normal(kx, (N, C_in, H, W), dtype=jnp.float32)
        weight = jax.random.normal(kw, (C_out, C_in, 1, 1), dtype=jnp.float32) * 0.1
        bias = jax.random.normal(kb, (C_out,), dtype=jnp.float32) * 0.1

        out = outconv_forward(x, weight, bias)
        jax.block_until_ready(out)

        ref = _reference(x, weight, bias)
        assert out.shape == (N, C_out, H, W)
        assert jnp.allclose(out, ref, atol=1e-3, rtol=1e-3), f"case {idx} mismatch"

    print("KERNEL_OK")
</pallas_src>

<mosaic_0001>
module attributes {stable_mosaic.version = 11 : i64} {
  func.func @kernel(%arg0: i32, %arg1: i32, %arg2: memref<8x4xf32, #tpu.memory_space<vmem>>, %arg3: memref<8x1xf32, #tpu.memory_space<vmem>>, %arg4: memref<1x4x256xf32, #tpu.memory_space<vmem>>, %arg5: memref<1x8x256xf32, #tpu.memory_space<vmem>>) attributes {dimension_semantics = [#tpu.dimension_semantics<parallel>, #tpu.dimension_semantics<parallel>], iteration_bounds = array<i64: 2, 1>, scalar_prefetch = 0 : i64, scratch_operands = 0 : i64, tpu.core_type = #tpu.core_type<tc>, window_params = [{pipeline_mode = #tpu.pipeline_mode<synchronous>, transform_indices = @transform_0, window_bounds = array<i64: 8, 4>}, {pipeline_mode = #tpu.pipeline_mode<synchronous>, transform_indices = @transform_1, window_bounds = array<i64: 8, 1>}, {transform_indices = @transform_2, window_bounds = array<i64: 1, 4, 256>}, {transform_indices = @transform_3, window_bounds = array<i64: 1, 8, 256>}]} {
    %c0 = arith.constant 0 : index
    %c0_0 = arith.constant 0 : index
    %c0_1 = arith.constant 0 : index
    %0 = vector.load %arg4[%c0, %c0_0, %c0_1] : memref<1x4x256xf32, #tpu.memory_space<vmem>>, vector<1x1x256xf32>
    %1 = vector.shape_cast %0 : vector<1x1x256xf32> to vector<1x256xf32>
    %c0_2 = arith.constant 0 : index
    %c0_3 = arith.constant 0 : index
    %2 = vector.load %arg2[%c0_2, %c0_3] : memref<8x4xf32, #tpu.memory_space<vmem>>, vector<8x1xf32>
    %3 = vector.broadcast %1 : vector<1x256xf32> to vector<8x256xf32>
    %4 = vector.broadcast %2 : vector<8x1xf32> to vector<8x256xf32>
    %5 = arith.mulf %3, %4 : vector<8x256xf32>
    %c0_4 = arith.constant 0 : index
    %c1 = arith.constant 1 : index
    %c0_5 = arith.constant 0 : index
    %6 = vector.load %arg4[%c0_4, %c1, %c0_5] : memref<1x4x256xf32, #tpu.memory_space<vmem>>, vector<1x1x256xf32>
    %7 = vector.shape_cast %6 : vector<1x1x256xf32> to vector<1x256xf32>
    %c0_6 = arith.constant 0 : index
    %c1_7 = arith.constant 1 : index
    %8 = vector.load %arg2[%c0_6, %c1_7] : memref<8x4xf32, #tpu.memory_space<vmem>>, vector<8x1xf32>
    %9 = vector.broadcast %7 : vector<1x256xf32> to vector<8x256xf32>
    %10 = vector.broadcast %8 : vector<8x1xf32> to vector<8x256xf32>
    %11 = arith.mulf %9, %10 : vector<8x256xf32>
    %12 = arith.addf %5, %11 : vector<8x256xf32>
    %c0_8 = arith.constant 0 : index
    %c2 = arith.constant 2 : index
    %c0_9 = arith.constant 0 : index
    %13 = vector.load %arg4[%c0_8, %c2, %c0_9] : memref<1x4x256xf32, #tpu.memory_space<vmem>>, vector<1x1x256xf32>
    %14 = vector.shape_cast %13 : vector<1x1x256xf32> to vector<1x256xf32>
    %c0_10 = arith.constant 0 : index
    %c2_11 = arith.constant 2 : index
    %15 = vector.load %arg2[%c0_10, %c2_11] : memref<8x4xf32, #tpu.memory_space<vmem>>, vector<8x1xf32>
    %16 = vector.broadcast %14 : vector<1x256xf32> to vector<8x256xf32>
    %17 = vector.broadcast %15 : vector<8x1xf32> to vector<8x256xf32>
    %18 = arith.mulf %16, %17 : vector<8x256xf32>
    %19 = arith.addf %12, %18 : vector<8x256xf32>
    %c0_12 = arith.constant 0 : index
    %c3 = arith.constant 3 : index
    %c0_13 = arith.constant 0 : index
    %20 = vector.load %arg4[%c0_12, %c3, %c0_13] : memref<1x4x256xf32, #tpu.memory_space<vmem>>, vector<1x1x256xf32>
    %21 = vector.shape_cast %20 : vector<1x1x256xf32> to vector<1x256xf32>
    %c0_14 = arith.constant 0 : index
    %c3_15 = arith.constant 3 : index
    %22 = vector.load %arg2[%c0_14, %c3_15] : memref<8x4xf32, #tpu.memory_space<vmem>>, vector<8x1xf32>
    %23 = vector.broadcast %21 : vector<1x256xf32> to vector<8x256xf32>
    %24 = vector.broadcast %22 : vector<8x1xf32> to vector<8x256xf32>
    %25 = arith.mulf %23, %24 : vector<8x256xf32>
    %26 = arith.addf %19, %25 : vector<8x256xf32>
    %c0_16 = arith.constant 0 : index
    %c0_17 = arith.constant 0 : index
    %27 = vector.load %arg3[%c0_16, %c0_17] : memref<8x1xf32, #tpu.memory_space<vmem>>, vector<8x1xf32>
    %28 = vector.broadcast %27 : vector<8x1xf32> to vector<8x256xf32>
    %29 = arith.addf %26, %28 : vector<8x256xf32>
    %c0_18 = arith.constant 0 : index
    %c0_19 = arith.constant 0 : index
    %c0_20 = arith.constant 0 : index
    %30 = vector.load %arg5[%c0_18, %c0_19, %c0_20] : memref<1x8x256xf32, #tpu.memory_space<vmem>>, vector<1x8x256xf32>
    %31 = vector.shape_cast %30 : vector<1x8x256xf32> to vector<8x256xf32>
    %32 = vector.shape_cast %29 : vector<8x256xf32> to vector<1x8x256xf32>
    tpu.vector_store %arg5[%c0_18, %c0_19, %c0_20], %32 {strides = array<i32>} : memref<1x8x256xf32, #tpu.memory_space<vmem>>, vector<1x8x256xf32>,
    return
  }
  func.func @transform_0(%arg0: i32, %arg1: i32) -> (i32, i32) {
    %c0_i32 = arith.constant 0 : i32
    %c0_i32_0 = arith.constant 0 : i32
    %c0_i32_1 = arith.constant 0 : i32
    return %c0_i32, %c0_i32_0 : i32, i32
  }
  func.func @transform_1(%arg0: i32, %arg1: i32) -> (i32, i32) {
    %c0_i32 = arith.constant 0 : i32
    %c0_i32_0 = arith.constant 0 : i32
    %c0_i32_1 = arith.constant 0 : i32
    return %c0_i32, %c0_i32_0 : i32, i32
  }
  func.func @transform_2(%arg0: i32, %arg1: i32) -> (i32, i32, i32) {
    %c0_i32 = arith.constant 0 : i32
    %c0_i32_0 = arith.constant 0 : i32
    return %arg0, %c0_i32, %arg1 : i32, i32, i32
  }
  func.func @transform_3(%arg0: i32, %arg1: i32) -> (i32, i32, i32) {
    %c0_i32 = arith.constant 0 : i32
    %c0_i32_0 = arith.constant 0 : i32
    return %arg0, %c0_i32, %arg1 : i32, i32, i32
  }
}

</mosaic_0001>

<llo_original>
// kernel: outconv_forward.1
$region0: #{outconv_forward.1}
  #allocation0 [shape = 'u32[]', space=smem, size = 0x4, offset = 0x4, fixed_abs, tag = 'smem constant byte address 0x4 - core index']
  #allocation1 [shape = 'u32[72,128]{1,0:T(1,128)}', space=vmem, size = 0x9000, scoped, tag = 'internal scratch']
  %s0 = inlined_call_operand.vmem [shape: f32[8,4], index: 0, kind: input, shape index: {}]
  %s1 = inlined_call_operand.vmem [shape: f32[8,1], index: 1, kind: input, shape index: {}]
  %s2 = inlined_call_operand.vmem [shape: f32[2,4,256], index: 2, kind: input, shape index: {}]
  %s3 = inlined_call_operand.vmem [shape: f32[2,8,256], index: 3, kind: output, shape index: {}]
  %s4 = sld [smem:[#allocation0]]
  $region45: #{outconv_forward.1} parent=0
    _
  %s6 = ssub.s32 1, %s4
  %s7 = scalar_select 0, %s6, %s4
  loop: start=0, step=1, limit=4
  $region2: #{outconv_forward.1} parent=0 // loop_pre_header
    _
  $region3: #{outconv_forward.1} parent=0 // loop_header
    %s9 = sphi 0, %s13
    %p10 = scmp.ge.s32.totalorder %s9, 4
    %s16 = sphi 0, %s28
    %s17 = sphi 0, %s24
    %s18 = sphi 0, %s16
    %s19 = sphi 0, %s17
    %s20 = sphi 0, %s18
    %s21 = sphi 0, %s19
    %s29 = sphi 0, %s29
    %s31 = sphi 0, %s29
    %s32 = sphi 0, %s31
    %s46 = sphi 0, %s32
    %s50 = sphi 0, %s50
    %s52 = sphi 0, %s50
    %s53 = sphi 0, %s52
    %s67 = sphi 0, %s53
    %s75 = sphi 0, %s77
    %s78 = sphi 0, %s75
    %s79 = sphi 0, %s78
    %s95 = sphi 0, %s79
    %s103 = sphi 0, %s105
    %s106 = sphi 0, %s103
    %s107 = sphi 0, %s106
    %s123 = sphi 0, %s107
  $region4: #{outconv_forward.1} parent=0 // loop_header_branch
    %12 = sbr.rel (%p10) target = $region8
  $region5: #{outconv_forward.1} parent=0 // loop_body
    %s14 = ssub.s32 %s9, 1
    %s15 = ssub.s32 %s9, 2
    %s22 = sadd.s32 1, %s17
    %p23 = scmp.ge.s32.totalorder %s22, 1
    %s24 = scalar_select %p23, 0, %s22
    %s25 = sadd.s32 1, %s16
    %s26 = scalar_select %p23, %s25, %s16
    %p27 = scmp.ge.s32.totalorder %s26, 2
    %s28 = scalar_select %p27, 0, %s26
    %s30 = sadd.s32 %s29, 1
    %p33 = scmp.eq.s32.totalorder %s9, 1
    %p34 = scmp.ne.s32.totalorder %s29, %s31
    %p35 = scmp.eq.s32.totalorder %s9, 0
    %p36 = por %p34, %p35
    %p37 = scmp.ne.s32.totalorder %s29, %s31
    %p38 = scmp.eq.s32.totalorder %s14, 1
    %p39 = por %p37, %p38
    %p40 = scmp.ne.s32.totalorder %s31, %s32
    %p41 = scmp.eq.s32.totalorder %s14, 0
    %p42 = por %p40, %p41
    %p43 = scmp.ne.s32.totalorder %s31, %s32
    %p44 = scmp.eq.s32.totalorder %s15, 1
    %p45 = por %p43, %p44
    %p47 = scmp.ne.s32.totalorder %s32, %s46
    %p48 = scmp.eq.s32.totalorder %s15, 0
    %p49 = por %p47, %p48
    %s51 = sadd.s32 %s50, 1
    %p54 = scmp.eq.s32.totalorder %s9, 1
    %p55 = scmp.ne.s32.totalorder %s50, %s52
    %p56 = scmp.eq.s32.totalorder %s9, 0
    %p57 = por %p55, %p56
    %p58 = scmp.ne.s32.totalorder %s50, %s52
    %p59 = scmp.eq.s32.totalorder %s14, 1
    %p60 = por %p58, %p59
    %p61 = scmp.ne.s32.totalorder %s52, %s53
    %p62 = scmp.eq.s32.totalorder %s14, 0
    %p63 = por %p61, %p62
    %p64 = scmp.ne.s32.totalorder %s52, %s53
    %p65 = scmp.eq.s32.totalorder %s15, 1
    %p66 = por %p64, %p65
    %p68 = scmp.ne.s32.totalorder %s53, %s67
    %p69 = scmp.eq.s32.totalorder %s15, 0
    %p70 = por %p68, %p69
    %s71 = ssub.s32 %s16, %s28
    %s72 = ssub.s32 %s17, %s24
    %s73 = sor.u32 %s71, %s72
    %p74 = scmp.eq.s32.totalorder %s73, 0
    %s76 = sadd.s32 %s75, 1
    %s77 = scalar_select %p74, %s75, %s76
    %p80 = pneg %p74
    %p81 = scmp.eq.s32.totalorder %s9, 1
    %p82 = por %p80, %p81
    %p83 = scmp.ne.s32.totalorder %s75, %s78
    %p84 = scmp.eq.s32.totalorder %s9, 0
    %p85 = por %p83, %p84
    %p86 = scmp.ne.s32.totalorder %s75, %s78
    %p87 = scmp.eq.s32.totalorder %s14, 1
    %p88 = por %p86, %p87
    %p89 = scmp.ne.s32.totalorder %s78, %s79
    %p90 = scmp.eq.s32.totalorder %s14, 0
    %p91 = por %p89, %p90
    %p92 = scmp.ne.s32.totalorder %s78, %s79
    %p93 = scmp.eq.s32.totalorder %s15, 1
    %p94 = por %p92, %p93
    %p96 = scmp.ne.s32.totalorder %s79, %s95
    %p97 = scmp.eq.s32.totalorder %s15, 0
    %p98 = por %p96, %p97
    %s99 = ssub.s32 %s16, %s28
    %s100 = ssub.s32 %s17, %s24
    %s101 = sor.u32 %s99, %s100
    %p102 = scmp.eq.s32.totalorder %s101, 0
    %s104 = sadd.s32 %s103, 1
    %s105 = scalar_select %p102, %s103, %s104
    %p108 = pneg %p102
    %p109 = scmp.eq.s32.totalorder %s9, 1
    %p110 = por %p108, %p109
    %p111 = scmp.ne.s32.totalorder %s103, %s106
    %p112 = scmp.eq.s32.totalorder %s9, 0
    %p113 = por %p111, %p112
    %p114 = scmp.ne.s32.totalorder %s103, %s106
    %p115 = scmp.eq.s32.totalorder %s14, 1
    %p116 = por %p114, %p115
    %p117 = scmp.ne.s32.totalorder %s106, %s107
    %p118 = scmp.eq.s32.totalorder %s14, 0
    %p119 = por %p117, %p118
    %p120 = scmp.ne.s32.totalorder %s106, %s107
    %p121 = scmp.eq.s32.totalorder %s15, 1
    %p122 = por %p120, %p121
    %p124 = scmp.ne.s32.totalorder %s107, %s123
    %p125 = scmp.eq.s32.totalorder %s15, 0
    %p126 = por %p124, %p125
    %p127 = scmp.le.s32.totalorder 1, %s9
    %p128 = scmp.lt.s32.totalorder %s9, 3
    %p129 = pnand %p127, %p128
    %p130 = pneg %p129
    // Predicated region
    $region9: #{outconv_forward.1} parent=5 // pred_check
      _
    $region10: #{outconv_forward.1} parent=5 // pred_check_branch
      %132 = sbr.rel (%p129) target = $region12
    $region11: #{outconv_forward.1} parent=5 // pred_region
      %s133 = ssub.s32 %s9, 1
      // Predicated region
      $region13: #{outconv_forward.1} parent=11 // pred_check
        %p134 = pneg %p42
      $region14: #{outconv_forward.1} parent=11 // pred_check_branch
        %136 = sbr.rel (%p134) target = $region16
      $region15: #{outconv_forward.1} parent=11 // pred_region
        _
      $region16: #{outconv_forward.1} parent=11 // pred_fallthru
        _
      // Predicated region
      $region17: #{outconv_forward.1} parent=11 // pred_check
        %p137 = pneg %p63
      $region18: #{outconv_forward.1} parent=11 // pred_check_branch
        %139 = sbr.rel (%p137) target = $region20
      $region19: #{outconv_forward.1} parent=11 // pred_region
        _
      $region20: #{outconv_forward.1} parent=11 // pred_fallthru
        _
    $region12: #{outconv_forward.1} parent=5 // pred_fallthru
      _
    %p140 = scmp.lt.s32.totalorder %s9, 2
    // Predicated region
    $region21: #{outconv_forward.1} parent=5 // pred_check
      %p141 = pneg %p140
    $region22: #{outconv_forward.1} parent=5 // pred_check_branch
      %143 = sbr.rel (%p141) target = $region24
    $region23: #{outconv_forward.1} parent=5 // pred_region
      // Predicated region
      $region25: #{outconv_forward.1} parent=23 // pred_check
        %p144 = pneg %p85
      $region26: #{outconv_forward.1} parent=23 // pred_check_branch
        %146 = sbr.rel (%p144) target = $region28
      $region27: #{outconv_forward.1} parent=23 // pred_region
        %s147 = smul.u32 2, %s17
        %p148 = scmp.lt.s32.totalorder %s16, 1
        %s149 = scalar_select %p148, %s16, 1
        %p150 = scmp.lt.s32.totalorder %s147, 1
        %s151 = scalar_select %p150, %s147, 1
        %s152 = smul.addr %s149, 2
        %s153 = sadd.s32 %s151, %s152
        %s154 = smul.addr %s153, 4
        %s155 = scalar_lea.vmem %s2, %s154
        %s156 = smul.u32 2, %s17
      $region28: #{outconv_forward.1} parent=23 // pred_fallthru
        _
    $region24: #{outconv_forward.1} parent=5 // pred_fallthru
      _
    %p157 = scmp.le.s32.totalorder 1, %s9
    %p158 = scmp.lt.s32.totalorder %s9, 3
    %p159 = pnand %p157, %p158
    %p160 = pneg %p159
    // Predicated region
    $region29: #{outconv_forward.1} parent=5 // pred_check
      _
    $region30: #{outconv_forward.1} parent=5 // pred_check_branch
      %162 = sbr.rel (%p159) target = $region32
    $region31: #{outconv_forward.1} parent=5 // pred_region
      %s163 = ssub.s32 %s9, 1
      %p164 = pneg %p42
      %p165 = pneg %p39
      %p166 = pneg %p63
      %p167 = pneg %p60
      %s168 = smul.u32 2, %s19
      %p169 = scmp.lt.s32.totalorder %s18, 1
      %s170 = scalar_select %p169, %s18, 1
      %p171 = scmp.lt.s32.totalorder %s168, 1
      %s172 = scalar_select %p171, %s168, 1
      %s173 = smul.addr %s170, 2
      %s174 = sadd.s32 %s172, %s173
      %s175 = smul.addr %s174, 4
      %s176 = scalar_lea.vmem %s2, %s175
      %p177 = pneg %p91
      %p178 = pneg %p88
      %p179 = pneg %p119
      %p180 = pneg %p116
      %s181 = smul.u32 2, %s19
      %p182 = scmp.lt.s32.totalorder %s18, 1
      %s183 = scalar_select %p182, %s18, 1
      %p184 = scmp.lt.s32.totalorder %s181, 1
      %s185 = scalar_select %p184, %s181, 1
      %s186 = smul.addr %s183, 2
      %s187 = sadd.s32 %s185, %s186
      %s188 = smul.addr %s187, 8
      %s189 = scalar_lea.vmem %s3, %s188
      %s190 = smul.u32 2, %s19
      %p191 = scmp.lt.s32.totalorder %s18, 1
      %s192 = scalar_select %p191, %s18, 1
      %p193 = scmp.lt.s32.totalorder %s190, 1
      %s194 = scalar_select %p193, %s190, 1
      %s195 = smul.addr %s192, 2
      %s196 = sadd.s32 %s194, %s195
      %s197 = smul.addr %s196, 4
      %s198 = scalar_lea.vmem %s2, %s197
      %s199 = smul.u32 2, %s19
      %s200 = smul.u32 2, %s19
      %p201 = scmp.lt.s32.totalorder %s18, 1
      %s202 = scalar_select %p201, %s18, 1
      %p203 = scmp.lt.s32.totalorder %s200, 1
      %s204 = scalar_select %p203, %s200, 1
      %s205 = smul.addr %s202, 2
      %s206 = sadd.s32 %s204, %s205
      %s207 = smul.addr %s206, 8
      %s208 = scalar_lea.vmem %s3, %s207
      %s209 = smul.u32 2, %s19
      %v210 = vld [vmem:[%s198] ss:$4 sm:$0x3]
      %v211 = vld [vmem:[%s0] sm:$0xff]
      %v213 = vperm.slane %v210, 0
      %v214 = vperm.slane %v210, 1
      %218 = vset.pattern.permute.xlu0 0
      %219 = vperm.xlu0 %218, %v211
      %v220 = vpop.permute.xlu0 %219
      %v222 = vmul.f32 %v213, %v220
      %v223 = vmul.f32 %v214, %v220
      %s224 = scalar_lea.vmem %s198, 1
      %v225 = vld [vmem:[%s224] ss:$4 sm:$0x3]
      %v227 = vperm.slane %v225, 0
      %v228 = vperm.slane %v225, 1
      %231 = vset.pattern.permute.xlu0 1
      %232 = vperm.xlu0 %231, %v211
      %v233 = vpop.permute.xlu0 %232
      %v235 = vmul.f32 %v227, %v233
      %v236 = vmul.f32 %v228, %v233
      %v237 = vadd.f32 %v222, %v235
      %v238 = vadd.f32 %v223, %v236
      %s239 = scalar_lea.vmem %s198, 2
      %v240 = vld [vmem:[%s239] ss:$4 sm:$0x3]
      %v242 = vperm.slane %v240, 0
      %v243 = vperm.slane %v240, 1
      %246 = vset.pattern.permute.xlu0 2
      %247 = vperm.xlu0 %246, %v211
      %v248 = vpop.permute.xlu0 %247
      %v250 = vmul.f32 %v242, %v248
      %v251 = vmul.f32 %v243, %v248
      %v252 = vadd.f32 %v237, %v250
      %v253 = vadd.f32 %v238, %v251
      %s254 = scalar_lea.vmem %s198, 3
      %v255 = vld [vmem:[%s254] ss:$4 sm:$0x3]
      %v257 = vperm.slane %v255, 0
      %v258 = vperm.slane %v255, 1
      %261 = vset.pattern.permute.xlu0 3
      %262 = vperm.xlu0 %261, %v211
      %v263 = vpop.permute.xlu0 %262
      %v265 = vmul.f32 %v257, %v263
      %v266 = vmul.f32 %v258, %v263
      %v267 = vadd.f32 %v252, %v265
      %v268 = vadd.f32 %v253, %v266
      %v269 = vld [vmem:[%s1] sm:$0xff]
      %271 = vset.pattern.permute.xlu0 0
      %272 = vperm.xlu0 %271, %v269
      %v273 = vpop.permute.xlu0 %272
      %v275 = vadd.f32 %v267, %v273
      %v276 = vadd.f32 %v268, %v273
      %277 = vst [vmem:[%s208] sm:$0xff] %v275
      %278 = vst [vmem:[%s208 + $0x8] sm:$0xff] %v276
      %s279 = smul.u32 2, %s19
      %p280 = scmp.lt.s32.totalorder %s18, 1
      %s281 = scalar_select %p280, %s18, 1
      %p282 = scmp.lt.s32.totalorder %s279, 1
      %s283 = scalar_select %p282, %s279, 1
      %s284 = smul.addr %s281, 2
      %s285 = sadd.s32 %s283, %s284
      %s286 = smul.addr %s285, 8
      %s287 = scalar_lea.vmem %s3, %s286
      // Predicated region
      $region33: #{outconv_forward.1} parent=31 // pred_check
        %p288 = pneg %p116
      $region34: #{outconv_forward.1} parent=31 // pred_check_branch
        %290 = sbr.rel (%p288) target = $region36
      $region35: #{outconv_forward.1} parent=31 // pred_region
        %s291 = smul.u32 2, %s19
      $region36: #{outconv_forward.1} parent=31 // pred_fallthru
        _
    $region32: #{outconv_forward.1} parent=5 // pred_fallthru
      _
    %p292 = scmp.le.s32.totalorder 2, %s9
    // Predicated region
    $region37: #{outconv_forward.1} parent=5 // pred_check
      %p293 = pneg %p292
    $region38: #{outconv_forward.1} parent=5 // pred_check_branch
      %295 = sbr.rel (%p293) target = $region40
    $region39: #{outconv_forward.1} parent=5 // pred_region
      %s296 = ssub.s32 %s9, 2
      // Predicated region
      $region41: #{outconv_forward.1} parent=39 // pred_check
        %p297 = pneg %p122
      $region42: #{outconv_forward.1} parent=39 // pred_check_branch
        %299 = sbr.rel (%p297) target = $region44
      $region43: #{outconv_forward.1} parent=39 // pred_region
        %s300 = smul.u32 2, %s21
        %p301 = scmp.lt.s32.totalorder %s20, 1
        %s302 = scalar_select %p301, %s20, 1
        %p303 = scmp.lt.s32.totalorder %s300, 1
        %s304 = scalar_select %p303, %s300, 1
        %s305 = smul.addr %s302, 2
        %s306 = sadd.s32 %s304, %s305
        %s307 = smul.addr %s306, 8
        %s308 = scalar_lea.vmem %s3, %s307
      $region44: #{outconv_forward.1} parent=39 // pred_fallthru
        _
    $region40: #{outconv_forward.1} parent=5 // pred_fallthru
      _
  $region6: #{outconv_forward.1} parent=0 // loop_footer
    %s13 = sadd.s32 1, %s9
  $region7: #{outconv_forward.1} parent=0 // loop_footer_branch
    %8 = sbr.rel target = $region3
  $region8: #{outconv_forward.1} parent=0 // loop_exit
    _

</llo_original>
